<compile_context>
chip_gen: v5e
topology: v5e:2x2
jax: 0.10.0
libtpu: 0.0.40
codegen_flags: <defaults>
</compile_context>

<pallas_src>
import jax
import jax.numpy as jnp
from jax.experimental import pallas as pl
from jax.experimental.pallas import tpu as pltpu


def _erf_f32(x):
    # Abramowitz & Stegun 7.1.26 rational approximation (max abs err ~1.5e-7,
    # i.e. at f32 resolution).  Not bit-identical to torch.erf, but within
    # float32 precision of nn.GELU(approximate='none').
    p = 0.3275911
    a1, a2, a3, a4, a5 = (0.254829592, -0.284496736, 1.421413741,
                          -1.453152027, 1.061405429)
    ax = jnp.abs(x)
    t = 1.0 / (1.0 + p * ax)
    poly = ((((a5 * t + a4) * t + a3) * t + a2) * t + a1) * t
    y = 1.0 - poly * jnp.exp(-ax * ax)
    return jnp.where(x < 0, -y, y)


def _gelu_exact(x):
    # nn.GELU() default: x * 0.5 * (1 + erf(x / sqrt(2)))
    return x * 0.5 * (1.0 + _erf_f32(x * 0.7071067811865476))


def _pool_classifier_kernel(emb_ref, mask_ref, den_ref, w1_ref, b1_ref,
                            w2_ref, b2_ref, out_ref, sum_acc):
    k = pl.program_id(1)

    @pl.when(k == 0)
    def _init():
        sum_acc[...] = jnp.zeros_like(sum_acc)

    bt = sum_acc.shape[0]
    # Masked partial sum over this sequence tile: bt independent (1, st)@(st, H)
    # bf16 matmuls on the MXU, accumulated in the f32 scratch.  Both operands
    # are already in their natural matmul layouts, so no relayout is needed and
    # the reduce stays hidden under the HBM stream.
    for b in range(bt):
        sum_acc[b:b + 1, :] += jnp.dot(
            mask_ref[b:b + 1, :], emb_ref[b],
            preferred_element_type=jnp.float32)

    @pl.when(k == pl.num_programs(1) - 1)
    def _finalize():
        # pooled = sum(emb * mask, 1) / clamp(sum(mask, 1), min=1e-9)
        pooled = sum_acc[...] / jnp.maximum(den_ref[...], 1e-9)      # (bt, H)

        # classifier: Dropout(id, eval) -> Linear -> GELU -> Dropout(id) -> Linear
        h = jnp.dot(pooled, w1_ref[...], preferred_element_type=jnp.float32)
        h = _gelu_exact(h + b1_ref[...])
        logits = jnp.dot(h, w2_ref[...], preferred_element_type=jnp.float32)
        out_ref[...] = logits + b2_ref[...]


def _vmem_capacity_bytes():
    # 128 MiB on v5e/v6e, 64 MiB per TensorCore on v7x.
    try:
        return int(pltpu.get_tpu_info().vmem_capacity_bytes)
    except Exception:
        return 64 * 1024 * 1024  # conservative fallback, safe on every gen


def _pick_tiles(B, S, H, L, batch_tile, seq_tile):
    cap = _vmem_capacity_bytes()
    ceiling = int(cap * 0.85)  # leave headroom for compiler-internal scratch

    # Batch tile: keep >=2 programs on the "parallel" grid axis where possible
    # (v7x has 2 TensorCores per chip).  The mask/out blocks put bt on the
    # sublane axis, so bt must be a multiple of 8 unless bt == B.
    if batch_tile is not None:
        bt = batch_tile
    else:
        bt = B
        for cand in (B // 2, B // 4, B // 8):
            if cand >= 8 and B % cand == 0 and cand % 8 == 0:
                bt = cand
                break

    # Sequence tile: as large as the VMEM budget allows (fewer grid steps,
    # larger DMAs).  st sits on the lane axis of the mask block, so it must be
    # a multiple of 128 unless it covers all of S.
    fixed = 4 * (2 * (H * H + H + H * L + L)   # weights/biases (<=2 buffers)
                 + 2 * bt * L                  # output tile
                 + bt * H                      # f32 accumulator scratch
                 + 2 * bt)                     # denominator tile
    per_s = 2 * bt * (2 * H + 2)               # bf16 emb + mask, double-buffered
    st_cap = max((int(ceiling * 0.8) - fixed) // per_s, 8)

    if seq_tile is not None:
        st = seq_tile
    elif S <= st_cap:
        st = S
    else:
        st = None
        for t in range((st_cap // 128) * 128, 127, -128):
            if S % t == 0:
                st = t
                break
        if st is None:
            st = S  # no suitable divisor: fall back to full sequence

    assert B % bt == 0 and S % st == 0, "wrapper requires divisible tiles"

    est = fixed + per_s * st
    vmem_limit = int(min(max(est * 2, 4 * 1024 * 1024), ceiling))
    return bt, st, vmem_limit


def _build_head_call(B, S, H, L, bt, st, vmem_limit, single_buffer_weights):
    if single_buffer_weights:
        # Grid-invariant operands: a single VMEM buffer is enough.
        def const(shape):
            return pl.BlockSpec(shape, lambda i, k: (0, 0),
                                pipeline_mode=pl.Buffered(1))
    else:
        def const(shape):
            return pl.BlockSpec(shape, lambda i, k: (0, 0))

    grid_spec = pltpu.PrefetchScalarGridSpec(
        num_scalar_prefetch=0,
        grid=(B // bt, S // st),
        in_specs=[
            pl.BlockSpec((bt, st, H), lambda i, k: (i, k, 0)),   # emb (bf16)
            pl.BlockSpec((bt, st), lambda i, k: (i, k)),         # mask (bf16)
            pl.BlockSpec((bt, 1), lambda i, k: (i, 0)),          # denom (f32)
            const((H, H)),                                       # w1
            const((1, H)),                                       # b1
            const((H, L)),                                       # w2
            const((1, L)),                                       # b2
        ],
        out_specs=pl.BlockSpec((bt, L), lambda i, k: (i, 0)),    # resident
        scratch_shapes=[pltpu.VMEM((bt, H), jnp.float32)],       # f32 pooled sum
    )
    return pl.pallas_call(
        _pool_classifier_kernel,
        out_shape=jax.ShapeDtypeStruct((B, L), jnp.float32),
        grid_spec=grid_spec,
        compiler_params=pltpu.CompilerParams(
            dimension_semantics=("parallel", "arbitrary"),
            vmem_limit_bytes=vmem_limit,
        ),
    )


def roberta_nonlinear_head(token_embeddings, attention_mask, w1, b1, w2, b2,
                           *, batch_tile=None, seq_tile=None):
    B, S, H = token_embeddings.shape
    L = w2.shape[1]

    # Stream the hidden states / mask as bf16 (the kernel accumulates in f32).
    # For peak performance the backbone should hand over bf16 directly; the
    # astype below is then a no-op.
    emb = token_embeddings.astype(jnp.bfloat16)
    mask_f32 = attention_mask.astype(jnp.float32)
    mask_bf = mask_f32.astype(jnp.bfloat16)
    # Denominator precomputed once on the tiny (B, S) mask (cheap vs the
    # (B, S, H) stream); clamp happens inside the kernel finalize.
    denom = mask_f32.sum(axis=1, keepdims=True)                   # (B, 1) f32

    bt, st, vmem_limit = _pick_tiles(B, S, H, L, batch_tile, seq_tile)
    args = (emb, mask_bf, denom, w1, b1, w2, b2)
    try:
        return _build_head_call(B, S, H, L, bt, st, vmem_limit, True)(*args)
    except Exception:
        # pl.Buffered(1) single-buffering of the invariant weights is purely an
        # optimization; fall back to default double-buffering if rejected.
        return _build_head_call(B, S, H, L, bt, st, vmem_limit, False)(*args)


if __name__ == "__main__":
    B, S, H, L, VOCAB = 2, 8, 32, 4, 100
    key = jax.random.PRNGKey(0)
    k_emb, k_ids, k_w1, k_w2 = jax.random.split(key, 4)

    # TODO(synk): RobertaModel.from_pretrained (frozen transformer backbone +
    # checkpoint load) has no in-script equivalent; stand in with a
    # deterministic frozen embedding table producing last_hidden_state.
    embed_table = jax.random.normal(k_emb, (VOCAB, H), jnp.float32)
    input_ids = jax.random.randint(k_ids, (B, S), 0, VOCAB)
    token_embeddings = jnp.take(embed_table, input_ids, axis=0)      # (B, S, H)

    lengths = jnp.array([S, 5])
    attention_mask = (jnp.arange(S)[None, :] < lengths[:, None]).astype(jnp.float32)

    # classifier init (matches __init__): weight ~ N(0, 0.02), bias = 0.
    # PyTorch Linear weight is (out, in); we store the transposed (in, out).
    w1 = (0.02 * jax.random.normal(k_w1, (H, H), jnp.float32)).T
    b1 = jnp.zeros((1, H), jnp.float32)
    w2 = (0.02 * jax.random.normal(k_w2, (L, H), jnp.float32)).T
    b2 = jnp.zeros((1, L), jnp.float32)

    logits = roberta_nonlinear_head(token_embeddings, attention_mask,
                                    w1, b1, w2, b2)
    logits = jax.block_until_ready(logits)

    # Plain-JAX reference of the kernel semantics (same bf16-quantized stream,
    # f32 accumulation / classifier).
    emb_q = token_embeddings.astype(jnp.bfloat16).astype(jnp.float32)
    m = attention_mask[:, :, None]
    pooled = (emb_q * m).sum(1) / jnp.maximum(m.sum(1), 1e-9)
    h = pooled @ w1 + b1
    h = 0.5 * h * (1.0 + jax.scipy.special.erf(h / jnp.sqrt(2.0)))
    ref = h @ w2 + b2
    assert jnp.allclose(logits, ref, atol=1e-4, rtol=1e-4), (logits, ref)

    # Optional labels path (plain-JAX glue): CrossEntropyLoss(label_smoothing=0.1)
    labels = jnp.array([1, 3])
    logp = jax.nn.log_softmax(logits, axis=-1)
    eps = 0.1
    tgt = (1.0 - eps) * jax.nn.one_hot(labels, L) + eps / L
    loss = -(tgt * logp).sum(-1).mean()
    jax.block_until_ready(loss)

    print("KERNEL_OK")
</pallas_src>

<mosaic_0001>
module attributes {stable_mosaic.version = 11 : i64} {
  func.func @_pool_classifier_kernel(%arg0: i32, %arg1: i32, %arg2: memref<2x8x32xbf16, #tpu.memory_space<vmem>>, %arg3: memref<2x8xbf16, #tpu.memory_space<vmem>>, %arg4: memref<2x1xf32, #tpu.memory_space<vmem>>, %arg5: memref<32x32xf32, #tpu.memory_space<vmem>>, %arg6: memref<1x32xf32, #tpu.memory_space<vmem>>, %arg7: memref<32x4xf32, #tpu.memory_space<vmem>>, %arg8: memref<1x4xf32, #tpu.memory_space<vmem>>, %arg9: memref<2x4xf32, #tpu.memory_space<vmem>>, %arg10: memref<2x32xf32, #tpu.memory_space<vmem>>) attributes {dimension_semantics = [#tpu.dimension_semantics<parallel>, #tpu.dimension_semantics<arbitrary>], iteration_bounds = array<i64: 1, 1>, scalar_prefetch = 0 : i64, scratch_operands = 1 : i64, tpu.core_type = #tpu.core_type<tc>, window_params = [{transform_indices = @transform_0, window_bounds = array<i64: 2, 8, 32>}, {transform_indices = @transform_1, window_bounds = array<i64: 2, 8>}, {transform_indices = @transform_2, window_bounds = array<i64: 2, 1>}, {pipeline_mode = #tpu.pipeline_mode<synchronous>, transform_indices = @transform_3, window_bounds = array<i64: 32, 32>}, {pipeline_mode = #tpu.pipeline_mode<synchronous>, transform_indices = @transform_4, window_bounds = array<i64: 1, 32>}, {pipeline_mode = #tpu.pipeline_mode<synchronous>, transform_indices = @transform_5, window_bounds = array<i64: 32, 4>}, {pipeline_mode = #tpu.pipeline_mode<synchronous>, transform_indices = @transform_6, window_bounds = array<i64: 1, 4>}, {transform_indices = @transform_7, window_bounds = array<i64: 2, 4>}]} {
    %c0_i32 = arith.constant 0 : i32
    %0 = arith.cmpi eq, %arg1, %c0_i32 : i32
    %1 = arith.extui %0 : i1 to i32
    %c0_i32_0 = arith.constant 0 : i32
    %2 = arith.cmpi ne, %1, %c0_i32_0 : i32
    scf.if %2 {
      %cst_20 = arith.constant 0.000000e+00 : f32
      %20 = vector.broadcast %cst_20 : f32 to vector<2x32xf32>
      %c0_21 = arith.constant 0 : index
      %c0_22 = arith.constant 0 : index
      %21 = vector.load %arg10[%c0_21, %c0_22] : memref<2x32xf32, #tpu.memory_space<vmem>>, vector<2x32xf32>
      tpu.vector_store %arg10[%c0_21, %c0_22], %20 {strides = array<i32>} : memref<2x32xf32, #tpu.memory_space<vmem>>, vector<2x32xf32>,
    } else {
    }
    %c0 = arith.constant 0 : index
    %c0_1 = arith.constant 0 : index
    %3 = vector.load %arg10[%c0, %c0_1] : memref<2x32xf32, #tpu.memory_space<vmem>>, vector<1x32xf32>
    %c0_2 = arith.constant 0 : index
    %c0_3 = arith.constant 0 : index
    %4 = vector.load %arg3[%c0_2, %c0_3] : memref<2x8xbf16, #tpu.memory_space<vmem>>, vector<1x8xbf16>
    %c0_4 = arith.constant 0 : index
    %c0_5 = arith.constant 0 : index
    %c0_6 = arith.constant 0 : index
    %5 = vector.load %arg2[%c0_4, %c0_5, %c0_6] : memref<2x8x32xbf16, #tpu.memory_space<vmem>>, vector<1x8x32xbf16>
    %6 = vector.shape_cast %5 : vector<1x8x32xbf16> to vector<8x32xbf16>
    %cst = arith.constant dense<0.000000e+00> : vector<1x32xf32>
    %7 = tpu.matmul %4, %6, %cst {dimension_numbers = #tpu.dot_dimension_numbers<[1], [0], [0], [1], [0, 0, 1, 1], [], []>} : vector<1x8xbf16>, vector<8x32xbf16>, vector<1x32xf32> -> vector<1x32xf32>
    %8 = arith.addf %3, %7 : vector<1x32xf32>
    %c0_7 = arith.constant 0 : index
    %c0_8 = arith.constant 0 : index
    %9 = vector.load %arg10[%c0_7, %c0_8] : memref<2x32xf32, #tpu.memory_space<vmem>>, vector<1x32xf32>
    tpu.vector_store %arg10[%c0_7, %c0_8], %8 {strides = array<i32>} : memref<2x32xf32, #tpu.memory_space<vmem>>, vector<1x32xf32>,
    %c1 = arith.constant 1 : index
    %c0_9 = arith.constant 0 : index
    %10 = vector.load %arg10[%c1, %c0_9] : memref<2x32xf32, #tpu.memory_space<vmem>>, vector<1x32xf32>
    %c1_10 = arith.constant 1 : index
    %c0_11 = arith.constant 0 : index
    %11 = vector.load %arg3[%c1_10, %c0_11] : memref<2x8xbf16, #tpu.memory_space<vmem>>, vector<1x8xbf16>
    %c1_12 = arith.constant 1 : index
    %c0_13 = arith.constant 0 : index
    %c0_14 = arith.constant 0 : index
    %12 = vector.load %arg2[%c1_12, %c0_13, %c0_14] : memref<2x8x32xbf16, #tpu.memory_space<vmem>>, vector<1x8x32xbf16>
    %13 = vector.shape_cast %12 : vector<1x8x32xbf16> to vector<8x32xbf16>
    %cst_15 = arith.constant dense<0.000000e+00> : vector<1x32xf32>
    %14 = tpu.matmul %11, %13, %cst_15 {dimension_numbers = #tpu.dot_dimension_numbers<[1], [0], [0], [1], [0, 0, 1, 1], [], []>} : vector<1x8xbf16>, vector<8x32xbf16>, vector<1x32xf32> -> vector<1x32xf32>
    %15 = arith.addf %10, %14 : vector<1x32xf32>
    %c1_16 = arith.constant 1 : index
    %c0_17 = arith.constant 0 : index
    %16 = vector.load %arg10[%c1_16, %c0_17] : memref<2x32xf32, #tpu.memory_space<vmem>>, vector<1x32xf32>
    tpu.vector_store %arg10[%c1_16, %c0_17], %15 {strides = array<i32>} : memref<2x32xf32, #tpu.memory_space<vmem>>, vector<1x32xf32>,
    %c0_i32_18 = arith.constant 0 : i32
    %17 = arith.cmpi eq, %arg1, %c0_i32_18 : i32
    %18 = arith.extui %17 : i1 to i32
    %c0_i32_19 = arith.constant 0 : i32
    %19 = arith.cmpi ne, %18, %c0_i32_19 : i32
    scf.if %19 {
      %c0_20 = arith.constant 0 : index
      %c0_21 = arith.constant 0 : index
      %20 = vector.load %arg10[%c0_20, %c0_21] : memref<2x32xf32, #tpu.memory_space<vmem>>, vector<2x32xf32>
      %c0_22 = arith.constant 0 : index
      %c0_23 = arith.constant 0 : index
      %21 = vector.load %arg4[%c0_22, %c0_23] : memref<2x1xf32, #tpu.memory_space<vmem>>, vector<2x1xf32>
      %cst_24 = arith.constant 9.99999971E-10 : f32
      %22 = vector.broadcast %cst_24 : f32 to vector<2x1xf32>
      %23 = arith.maximumf %21, %22 : vector<2x1xf32>
      %24 = vector.broadcast %23 : vector<2x1xf32> to vector<2x32xf32>
      %25 = arith.divf %20, %24 : vector<2x32xf32>
      %c0_25 = arith.constant 0 : index
      %c0_26 = arith.constant 0 : index
      %26 = vector.load %arg5[%c0_25, %c0_26] : memref<32x32xf32, #tpu.memory_space<vmem>>, vector<32x32xf32>
      %cst_27 = arith.constant dense<0.000000e+00> : vector<2x32xf32>
      %27 = tpu.matmul %25, %26, %cst_27 {dimension_numbers = #tpu.dot_dimension_numbers<[1], [0], [0], [1], [0, 0, 1, 1], [], []>} : vector<2x32xf32>, vector<32x32xf32>, vector<2x32xf32> -> vector<2x32xf32>
      %c0_28 = arith.constant 0 : index
      %c0_29 = arith.constant 0 : index
      %28 = vector.load %arg6[%c0_28, %c0_29] : memref<1x32xf32, #tpu.memory_space<vmem>>, vector<1x32xf32>
      %29 = vector.broadcast %28 : vector<1x32xf32> to vector<2x32xf32>
      %30 = arith.addf %27, %29 : vector<2x32xf32>
      %cst_30 = arith.constant 5.000000e-01 : f32
      %31 = vector.broadcast %cst_30 : f32 to vector<2x32xf32>
      %32 = arith.mulf %30, %31 : vector<2x32xf32>
      %cst_31 = arith.constant 0.707106769 : f32
      %33 = vector.broadcast %cst_31 : f32 to vector<2x32xf32>
      %34 = arith.mulf %30, %33 : vector<2x32xf32>
      %35 = math.absf %34 : vector<2x32xf32>
      %cst_32 = arith.constant 0.327591091 : f32
      %36 = vector.broadcast %cst_32 : f32 to vector<2x32xf32>
      %37 = arith.mulf %36, %35 : vector<2x32xf32>
      %cst_33 = arith.constant 1.000000e+00 : f32
      %38 = vector.broadcast %cst_33 : f32 to vector<2x32xf32>
      %39 = arith.addf %38, %37 : vector<2x32xf32>
      %cst_34 = arith.constant 1.000000e+00 : f32
      %40 = vector.broadcast %cst_34 : f32 to vector<2x32xf32>
      %41 = arith.divf %40, %39 : vector<2x32xf32>
      %cst_35 = arith.constant 1.06140542 : f32
      %42 = vector.broadcast %cst_35 : f32 to vector<2x32xf32>
      %43 = arith.mulf %42, %41 : vector<2x32xf32>
      %cst_36 = arith.constant -1.45315206 : f32
      %44 = vector.broadcast %cst_36 : f32 to vector<2x32xf32>
      %45 = arith.addf %43, %44 : vector<2x32xf32>
      %46 = arith.mulf %45, %41 : vector<2x32xf32>
      %cst_37 = arith.constant 1.42141378 : f32
      %47 = vector.broadcast %cst_37 : f32 to vector<2x32xf32>
      %48 = arith.addf %46, %47 : vector<2x32xf32>
      %49 = arith.mulf %48, %41 : vector<2x32xf32>
      %cst_38 = arith.constant -0.284496725 : f32
      %50 = vector.broadcast %cst_38 : f32 to vector<2x32xf32>
      %51 = arith.addf %49, %50 : vector<2x32xf32>
      %52 = arith.mulf %51, %41 : vector<2x32xf32>
      %cst_39 = arith.constant 0.254829586 : f32
      %53 = vector.broadcast %cst_39 : f32 to vector<2x32xf32>
      %54 = arith.addf %52, %53 : vector<2x32xf32>
      %55 = arith.mulf %54, %41 : vector<2x32xf32>
      %cst_40 = arith.constant 0.000000e+00 : f32
      %56 = vector.broadcast %cst_40 : f32 to vector<2x32xf32>
      %57 = arith.subf %56, %35 : vector<2x32xf32>
      %58 = arith.mulf %57, %35 : vector<2x32xf32>
      %59 = math.exp %58 : vector<2x32xf32>
      %60 = arith.mulf %55, %59 : vector<2x32xf32>
      %cst_41 = arith.constant 1.000000e+00 : f32
      %61 = vector.broadcast %cst_41 : f32 to vector<2x32xf32>
      %62 = arith.subf %61, %60 : vector<2x32xf32>
      %cst_42 = arith.constant 0.000000e+00 : f32
      %63 = vector.broadcast %cst_42 : f32 to vector<2x32xf32>
      %64 = arith.cmpf olt, %34, %63 : vector<2x32xf32>
      %cst_43 = arith.constant 0.000000e+00 : f32
      %65 = vector.broadcast %cst_43 : f32 to vector<2x32xf32>
      %66 = arith.subf %65, %62 : vector<2x32xf32>
      %67 = arith.select %64, %66, %62 : vector<2x32xi1>, vector<2x32xf32>
      %cst_44 = arith.constant 1.000000e+00 : f32
      %68 = vector.broadcast %cst_44 : f32 to vector<2x32xf32>
      %69 = arith.addf %68, %67 : vector<2x32xf32>
      %70 = arith.mulf %32, %69 : vector<2x32xf32>
      %c0_45 = arith.constant 0 : index
      %c0_46 = arith.constant 0 : index
      %71 = vector.load %arg7[%c0_45, %c0_46] : memref<32x4xf32, #tpu.memory_space<vmem>>, vector<32x4xf32>
      %cst_47 = arith.constant dense<0.000000e+00> : vector<2x4xf32>
      %72 = tpu.matmul %70, %71, %cst_47 {dimension_numbers = #tpu.dot_dimension_numbers<[1], [0], [0], [1], [0, 0, 1, 1], [], []>} : vector<2x32xf32>, vector<32x4xf32>, vector<2x4xf32> -> vector<2x4xf32>
      %c0_48 = arith.constant 0 : index
      %c0_49 = arith.constant 0 : index
      %73 = vector.load %arg8[%c0_48, %c0_49] : memref<1x4xf32, #tpu.memory_space<vmem>>, vector<1x4xf32>
      %74 = vector.broadcast %73 : vector<1x4xf32> to vector<2x4xf32>
      %75 = arith.addf %72, %74 : vector<2x4xf32>
      %c0_50 = arith.constant 0 : index
      %c0_51 = arith.constant 0 : index
      %76 = vector.load %arg9[%c0_50, %c0_51] : memref<2x4xf32, #tpu.memory_space<vmem>>, vector<2x4xf32>
      tpu.vector_store %arg9[%c0_50, %c0_51], %75 {strides = array<i32>} : memref<2x4xf32, #tpu.memory_space<vmem>>, vector<2x4xf32>,
    } else {
    }
    return
  }
  func.func @transform_0(%arg0: i32, %arg1: i32) -> (i32, i32, i32) {
    %c0_i32 = arith.constant 0 : i32
    %c0_i32_0 = arith.constant 0 : i32
    return %arg0, %arg1, %c0_i32 : i32, i32, i32
  }
  func.func @transform_1(%arg0: i32, %arg1: i32) -> (i32, i32) {
    %c0_i32 = arith.constant 0 : i32
    return %arg0, %arg1 : i32, i32
  }
  func.func @transform_2(%arg0: i32, %arg1: i32) -> (i32, i32) {
    %c0_i32 = arith.constant 0 : i32
    %c0_i32_0 = arith.constant 0 : i32
    return %arg0, %c0_i32 : i32, i32
  }
  func.func @transform_3(%arg0: i32, %arg1: i32) -> (i32, i32) {
    %c0_i32 = arith.constant 0 : i32
    %c0_i32_0 = arith.constant 0 : i32
    %c0_i32_1 = arith.constant 0 : i32
    return %c0_i32, %c0_i32_0 : i32, i32
  }
  func.func @transform_4(%arg0: i32, %arg1: i32) -> (i32, i32) {
    %c0_i32 = arith.constant 0 : i32
    %c0_i32_0 = arith.constant 0 : i32
    %c0_i32_1 = arith.constant 0 : i32
    return %c0_i32, %c0_i32_0 : i32, i32
  }
  func.func @transform_5(%arg0: i32, %arg1: i32) -> (i32, i32) {
    %c0_i32 = arith.constant 0 : i32
    %c0_i32_0 = arith.constant 0 : i32
    %c0_i32_1 = arith.constant 0 : i32
    return %c0_i32, %c0_i32_0 : i32, i32
  }
  func.func @transform_6(%arg0: i32, %arg1: i32) -> (i32, i32) {
    %c0_i32 = arith.constant 0 : i32
    %c0_i32_0 = arith.constant 0 : i32
    %c0_i32_1 = arith.constant 0 : i32
    return %c0_i32, %c0_i32_0 : i32, i32
  }
  func.func @transform_7(%arg0: i32, %arg1: i32) -> (i32, i32) {
    %c0_i32 = arith.constant 0 : i32
    %c0_i32_0 = arith.constant 0 : i32
    return %arg0, %c0_i32 : i32, i32
  }
}

module attributes {stable_mosaic.version = 11 : i64} {
  func.func @_pool_classifier_kernel(%arg0: i32, %arg1: i32, %arg2: memref<2x8x32xbf16, #tpu.memory_space<vmem>>, %arg3: memref<2x8xbf16, #tpu.memory_space<vmem>>, %arg4: memref<2x1xf32, #tpu.memory_space<vmem>>, %arg5: memref<32x32xf32, #tpu.memory_space<vmem>>, %arg6: memref<1x32xf32, #tpu.memory_space<vmem>>, %arg7: memref<32x4xf32, #tpu.memory_space<vmem>>, %arg8: memref<1x4xf32, #tpu.memory_space<vmem>>, %arg9: memref<2x4xf32, #tpu.memory_space<vmem>>, %arg10: memref<2x32xf32, #tpu.memory_space<vmem>>) attributes {dimension_semantics = [#tpu.dimension_semantics<parallel>, #tpu.dimension_semantics<arbitrary>], iteration_bounds = array<i64: 1, 1>, scalar_prefetch = 0 : i64, scratch_operands = 1 : i64, tpu.core_type = #tpu.core_type<tc>, window_params = [{transform_indices = @transform_0, window_bounds = array<i64: 2, 8, 32>}, {transform_indices = @transform_1, window_bounds = array<i64: 2, 8>}, {transform_indices = @transform_2, window_bounds = array<i64: 2, 1>}, {pipeline_mode = #tpu.pipeline_mode<synchronous>, transform_indices = @transform_3, window_bounds = array<i64: 32, 32>}, {pipeline_mode = #tpu.pipeline_mode<synchronous>, transform_indices = @transform_4, window_bounds = array<i64: 1, 32>}, {pipeline_mode = #tpu.pipeline_mode<synchronous>, transform_indices = @transform_5, window_bounds = array<i64: 32, 4>}, {pipeline_mode = #tpu.pipeline_mode<synchronous>, transform_indices = @transform_6, window_bounds = array<i64: 1, 4>}, {transform_indices = @transform_7, window_bounds = array<i64: 2, 4>}]} {
    %c0_i32 = arith.constant 0 : i32
    %0 = arith.cmpi eq, %arg1, %c0_i32 : i32
    %1 = arith.extui %0 : i1 to i32
    %c0_i32_0 = arith.constant 0 : i32
    %2 = arith.cmpi ne, %1, %c0_i32_0 : i32
    scf.if %2 {
      %cst_20 = arith.constant 0.000000e+00 : f32
      %20 = vector.broadcast %cst_20 : f32 to vector<2x32xf32>
      %c0_21 = arith.constant 0 : index
      %c0_22 = arith.constant 0 : index
      %21 = vector.load %arg10[%c0_21, %c0_22] : memref<2x32xf32, #tpu.memory_space<vmem>>, vector<2x32xf32>
      tpu.vector_store %arg10[%c0_21, %c0_22], %20 {strides = array<i32>} : memref<2x32xf32, #tpu.memory_space<vmem>>, vector<2x32xf32>,
    } else {
    }
    %c0 = arith.constant 0 : index
    %c0_1 = arith.constant 0 : index
    %3 = vector.load %arg10[%c0, %c0_1] : memref<2x32xf32, #tpu.memory_space<vmem>>, vector<1x32xf32>
    %c0_2 = arith.constant 0 : index
    %c0_3 = arith.constant 0 : index
    %4 = vector.load %arg3[%c0_2, %c0_3] : memref<2x8xbf16, #tpu.memory_space<vmem>>, vector<1x8xbf16>
    %c0_4 = arith.constant 0 : index
    %c0_5 = arith.constant 0 : index
    %c0_6 = arith.constant 0 : index
    %5 = vector.load %arg2[%c0_4, %c0_5, %c0_6] : memref<2x8x32xbf16, #tpu.memory_space<vmem>>, vector<1x8x32xbf16>
    %6 = vector.shape_cast %5 : vector<1x8x32xbf16> to vector<8x32xbf16>
    %cst = arith.constant dense<0.000000e+00> : vector<1x32xf32>
    %7 = tpu.matmul %4, %6, %cst {dimension_numbers = #tpu.dot_dimension_numbers<[1], [0], [0], [1], [0, 0, 1, 1], [], []>} : vector<1x8xbf16>, vector<8x32xbf16>, vector<1x32xf32> -> vector<1x32xf32>
    %8 = arith.addf %3, %7 : vector<1x32xf32>
    %c0_7 = arith.constant 0 : index
    %c0_8 = arith.constant 0 : index
    %9 = vector.load %arg10[%c0_7, %c0_8] : memref<2x32xf32, #tpu.memory_space<vmem>>, vector<1x32xf32>
    tpu.vector_store %arg10[%c0_7, %c0_8], %8 {strides = array<i32>} : memref<2x32xf32, #tpu.memory_space<vmem>>, vector<1x32xf32>,
    %c1 = arith.constant 1 : index
    %c0_9 = arith.constant 0 : index
    %10 = vector.load %arg10[%c1, %c0_9] : memref<2x32xf32, #tpu.memory_space<vmem>>, vector<1x32xf32>
    %c1_10 = arith.constant 1 : index
    %c0_11 = arith.constant 0 : index
    %11 = vector.load %arg3[%c1_10, %c0_11] : memref<2x8xbf16, #tpu.memory_space<vmem>>, vector<1x8xbf16>
    %c1_12 = arith.constant 1 : index
    %c0_13 = arith.constant 0 : index
    %c0_14 = arith.constant 0 : index
    %12 = vector.load %arg2[%c1_12, %c0_13, %c0_14] : memref<2x8x32xbf16, #tpu.memory_space<vmem>>, vector<1x8x32xbf16>
    %13 = vector.shape_cast %12 : vector<1x8x32xbf16> to vector<8x32xbf16>
    %cst_15 = arith.constant dense<0.000000e+00> : vector<1x32xf32>
    %14 = tpu.matmul %11, %13, %cst_15 {dimension_numbers = #tpu.dot_dimension_numbers<[1], [0], [0], [1], [0, 0, 1, 1], [], []>} : vector<1x8xbf16>, vector<8x32xbf16>, vector<1x32xf32> -> vector<1x32xf32>
    %15 = arith.addf %10, %14 : vector<1x32xf32>
    %c1_16 = arith.constant 1 : index
    %c0_17 = arith.constant 0 : index
    %16 = vector.load %arg10[%c1_16, %c0_17] : memref<2x32xf32, #tpu.memory_space<vmem>>, vector<1x32xf32>
    tpu.vector_store %arg10[%c1_16, %c0_17], %15 {strides = array<i32>} : memref<2x32xf32, #tpu.memory_space<vmem>>, vector<1x32xf32>,
    %c0_i32_18 = arith.constant 0 : i32
    %17 = arith.cmpi eq, %arg1, %c0_i32_18 : i32
    %18 = arith.extui %17 : i1 to i32
    %c0_i32_19 = arith.constant 0 : i32
    %19 = arith.cmpi ne, %18, %c0_i32_19 : i32
    scf.if %19 {
      %c0_20 = arith.constant 0 : index
      %c0_21 = arith.constant 0 : index
      %20 = vector.load %arg10[%c0_20, %c0_21] : memref<2x32xf32, #tpu.memory_space<vmem>>, vector<2x32xf32>
      %c0_22 = arith.constant 0 : index
      %c0_23 = arith.constant 0 : index
      %21 = vector.load %arg4[%c0_22, %c0_23] : memref<2x1xf32, #tpu.memory_space<vmem>>, vector<2x1xf32>
      %cst_24 = arith.constant 9.99999971E-10 : f32
      %22 = vector.broadcast %cst_24 : f32 to vector<2x1xf32>
      %23 = arith.maximumf %21, %22 : vector<2x1xf32>
      %24 = vector.broadcast %23 : vector<2x1xf32> to vector<2x32xf32>
      %25 = arith.divf %20, %24 : vector<2x32xf32>
      %c0_25 = arith.constant 0 : index
      %c0_26 = arith.constant 0 : index
      %26 = vector.load %arg5[%c0_25, %c0_26] : memref<32x32xf32, #tpu.memory_space<vmem>>, vector<32x32xf32>
      %cst_27 = arith.constant dense<0.000000e+00> : vector<2x32xf32>
      %27 = tpu.matmul %25, %26, %cst_27 {dimension_numbers = #tpu.dot_dimension_numbers<[1], [0], [0], [1], [0, 0, 1, 1], [], []>} : vector<2x32xf32>, vector<32x32xf32>, vector<2x32xf32> -> vector<2x32xf32>
      %c0_28 = arith.constant 0 : index
      %c0_29 = arith.constant 0 : index
      %28 = vector.load %arg6[%c0_28, %c0_29] : memref<1x32xf32, #tpu.memory_space<vmem>>, vector<1x32xf32>
      %29 = vector.broadcast %28 : vector<1x32xf32> to vector<2x32xf32>
      %30 = arith.addf %27, %29 : vector<2x32xf32>
      %cst_30 = arith.constant 5.000000e-01 : f32
      %31 = vector.broadcast %cst_30 : f32 to vector<2x32xf32>
      %32 = arith.mulf %30, %31 : vector<2x32xf32>
      %cst_31 = arith.constant 0.707106769 : f32
      %33 = vector.broadcast %cst_31 : f32 to vector<2x32xf32>
      %34 = arith.mulf %30, %33 : vector<2x32xf32>
      %35 = math.absf %34 : vector<2x32xf32>
      %cst_32 = arith.constant 0.327591091 : f32
      %36 = vector.broadcast %cst_32 : f32 to vector<2x32xf32>
      %37 = arith.mulf %36, %35 : vector<2x32xf32>
      %cst_33 = arith.constant 1.000000e+00 : f32
      %38 = vector.broadcast %cst_33 : f32 to vector<2x32xf32>
      %39 = arith.addf %38, %37 : vector<2x32xf32>
      %cst_34 = arith.constant 1.000000e+00 : f32
      %40 = vector.broadcast %cst_34 : f32 to vector<2x32xf32>
      %41 = arith.divf %40, %39 : vector<2x32xf32>
      %cst_35 = arith.constant 1.06140542 : f32
      %42 = vector.broadcast %cst_35 : f32 to vector<2x32xf32>
      %43 = arith.mulf %42, %41 : vector<2x32xf32>
      %cst_36 = arith.constant -1.45315206 : f32
      %44 = vector.broadcast %cst_36 : f32 to vector<2x32xf32>
      %45 = arith.addf %43, %44 : vector<2x32xf32>
      %46 = arith.mulf %45, %41 : vector<2x32xf32>
      %cst_37 = arith.constant 1.42141378 : f32
      %47 = vector.broadcast %cst_37 : f32 to vector<2x32xf32>
      %48 = arith.addf %46, %47 : vector<2x32xf32>
      %49 = arith.mulf %48, %41 : vector<2x32xf32>
      %cst_38 = arith.constant -0.284496725 : f32
      %50 = vector.broadcast %cst_38 : f32 to vector<2x32xf32>
      %51 = arith.addf %49, %50 : vector<2x32xf32>
      %52 = arith.mulf %51, %41 : vector<2x32xf32>
      %cst_39 = arith.constant 0.254829586 : f32
      %53 = vector.broadcast %cst_39 : f32 to vector<2x32xf32>
      %54 = arith.addf %52, %53 : vector<2x32xf32>
      %55 = arith.mulf %54, %41 : vector<2x32xf32>
      %cst_40 = arith.constant 0.000000e+00 : f32
      %56 = vector.broadcast %cst_40 : f32 to vector<2x32xf32>
      %57 = arith.subf %56, %35 : vector<2x32xf32>
      %58 = arith.mulf %57, %35 : vector<2x32xf32>
      %59 = math.exp %58 : vector<2x32xf32>
      %60 = arith.mulf %55, %59 : vector<2x32xf32>
      %cst_41 = arith.constant 1.000000e+00 : f32
      %61 = vector.broadcast %cst_41 : f32 to vector<2x32xf32>
      %62 = arith.subf %61, %60 : vector<2x32xf32>
      %cst_42 = arith.constant 0.000000e+00 : f32
      %63 = vector.broadcast %cst_42 : f32 to vector<2x32xf32>
      %64 = arith.cmpf olt, %34, %63 : vector<2x32xf32>
      %cst_43 = arith.constant 0.000000e+00 : f32
      %65 = vector.broadcast %cst_43 : f32 to vector<2x32xf32>
      %66 = arith.subf %65, %62 : vector<2x32xf32>
      %67 = arith.select %64, %66, %62 : vector<2x32xi1>, vector<2x32xf32>
      %cst_44 = arith.constant 1.000000e+00 : f32
      %68 = vector.broadcast %cst_44 : f32 to vector<2x32xf32>
      %69 = arith.addf %68, %67 : vector<2x32xf32>
      %70 = arith.mulf %32, %69 : vector<2x32xf32>
      %c0_45 = arith.constant 0 : index
      %c0_46 = arith.constant 0 : index
      %71 = vector.load %arg7[%c0_45, %c0_46] : memref<32x4xf32, #tpu.memory_space<vmem>>, vector<32x4xf32>
      %cst_47 = arith.constant dense<0.000000e+00> : vector<2x4xf32>
      %72 = tpu.matmul %70, %71, %cst_47 {dimension_numbers = #tpu.dot_dimension_numbers<[1], [0], [0], [1], [0, 0, 1, 1], [], []>} : vector<2x32xf32>, vector<32x4xf32>, vector<2x4xf32> -> vector<2x4xf32>
      %c0_48 = arith.constant 0 : index
      %c0_49 = arith.constant 0 : index
      %73 = vector.load %arg8[%c0_48, %c0_49] : memref<1x4xf32, #tpu.memory_space<vmem>>, vector<1x4xf32>
      %74 = vector.broadcast %73 : vector<1x4xf32> to vector<2x4xf32>
      %75 = arith.addf %72, %74 : vector<2x4xf32>
      %c0_50 = arith.constant 0 : index
      %c0_51 = arith.constant 0 : index
      %76 = vector.load %arg9[%c0_50, %c0_51] : memref<2x4xf32, #tpu.memory_space<vmem>>, vector<2x4xf32>
      tpu.vector_store %arg9[%c0_50, %c0_51], %75 {strides = array<i32>} : memref<2x4xf32, #tpu.memory_space<vmem>>, vector<2x4xf32>,
    } else {
    }
    return
  }
  func.func @transform_0(%arg0: i32, %arg1: i32) -> (i32, i32, i32) {
    %c0_i32 = arith.constant 0 : i32
    %c0_i32_0 = arith.constant 0 : i32
    return %arg0, %arg1, %c0_i32 : i32, i32, i32
  }
  func.func @transform_1(%arg0: i32, %arg1: i32) -> (i32, i32) {
    %c0_i32 = arith.constant 0 : i32
    return %arg0, %arg1 : i32, i32
  }
  func.func @transform_2(%arg0: i32, %arg1: i32) -> (i32, i32) {
    %c0_i32 = arith.constant 0 : i32
    %c0_i32_0 = arith.constant 0 : i32
    return %arg0, %c0_i32 : i32, i32
  }
  func.func @transform_3(%arg0: i32, %arg1: i32) -> (i32, i32) {
    %c0_i32 = arith.constant 0 : i32
    %c0_i32_0 = arith.constant 0 : i32
    %c0_i32_1 = arith.constant 0 : i32
    return %c0_i32, %c0_i32_0 : i32, i32
  }
  func.func @transform_4(%arg0: i32, %arg1: i32) -> (i32, i32) {
    %c0_i32 = arith.constant 0 : i32
    %c0_i32_0 = arith.constant 0 : i32
    %c0_i32_1 = arith.constant 0 : i32
    return %c0_i32, %c0_i32_0 : i32, i32
  }
  func.func @transform_5(%arg0: i32, %arg1: i32) -> (i32, i32) {
    %c0_i32 = arith.constant 0 : i32
    %c0_i32_0 = arith.constant 0 : i32
    %c0_i32_1 = arith.constant 0 : i32
    return %c0_i32, %c0_i32_0 : i32, i32
  }
  func.func @transform_6(%arg0: i32, %arg1: i32) -> (i32, i32) {
    %c0_i32 = arith.constant 0 : i32
    %c0_i32_0 = arith.constant 0 : i32
    %c0_i32_1 = arith.constant 0 : i32
    return %c0_i32, %c0_i32_0 : i32, i32
  }
  func.func @transform_7(%arg0: i32, %arg1: i32) -> (i32, i32) {
    %c0_i32 = arith.constant 0 : i32
    %c0_i32_0 = arith.constant 0 : i32
    return %arg0, %c0_i32 : i32, i32
  }
}

</mosaic_0001>

<llo_original>
// kernel: tpu_custom_call.1
$region0: #{tpu_custom_call.1}
  #allocation0 [shape = 'u32[]', space=smem, size = 0x4, offset = 0x4, fixed_abs, tag = 'smem constant byte address 0x4 - core index']
  #allocation1 [shape = 'u32[72,128]{1,0:T(1,128)}', space=vmem, size = 0x9000, scoped, tag = 'internal scratch']
  #allocation2 [shape = 'f32[2,32]{1,0:T(2,128)}', space=vmem, size = 0x400, scoped, tag = 'scratch operand']
  %s0 = inlined_call_operand.hbm [shape: bf16[2,8,32], index: 0, kind: input, shape index: {}]
  %s1 = inlined_call_operand.vmem [shape: bf16[2,8], index: 1, kind: input, shape index: {}]
  %s2 = inlined_call_operand.vmem [shape: f32[2,1], index: 2, kind: input, shape index: {}]
  %s3 = inlined_call_operand.vmem [shape: f32[32,32], index: 3, kind: input, shape index: {}]
  %s4 = inlined_call_operand.vmem [shape: f32[1,32], index: 4, kind: input, shape index: {}]
  %s5 = inlined_call_operand.vmem [shape: f32[32,4], index: 5, kind: input, shape index: {}]
  %s6 = inlined_call_operand.vmem [shape: f32[1,4], index: 6, kind: input, shape index: {}]
  %s7 = inlined_call_operand.hbm [shape: f32[2,4], index: 7, kind: output, shape index: {}]
  %s8 = sld [smem:[#allocation0]]
  $region50: #{tpu_custom_call.1} parent=0
    _
  %s10 = ssub.s32 1, %s8
  %s11 = scalar_select 0, %s10, %s8
  $region1: #{tpu_custom_call.1} parent=0
    #allocation3 [shape = 'u8[4096]{0}', space=vmem, size = 0x1000, scoped, tag = 'input window, operand 0, single buffered']
    #allocation4 [shape = 's32[1]{0}', space=sflag, size = 0x4, scoped, tag = 'scoped memory for tpu_custom_call.1']
    #allocation5 [shape = 's32[1]{0}', space=sflag, size = 0x4, scoped, tag = 'scoped memory for tpu_custom_call.1']
    #allocation6 [shape = 'u8[1024]{0}', space=vmem, size = 0x400, scoped, tag = 'output window, operand 0, single buffered']
    %12 = vsyncpa [#allocation4], 0
    %13 = vsyncpa [#allocation5], 0
    // Predicated region
    $region2: #{tpu_custom_call.1} parent=1 // pred_check
      _
    $region3: #{tpu_custom_call.1} parent=1 // pred_check_branch
      %15 = sbr.rel (0) target = $region5
    $region4: #{tpu_custom_call.1} parent=1 // pred_region
      %17 = vsyncadd [#allocation4], 0
      %s18 = sshll.u32 %s0, 4
      %s19 = int_to_ptr.hbm [resolvable:$true] %s18
      %s20 = sshll.u32 [#allocation3], 4
      %s21 = int_to_ptr.vmem [resolvable:$true] %s20
      %26 = dma.hbm_to_vmem [thread:$0]  %s19, 128, %s21, [#allocation4], 64, 64, 4
    $region5: #{tpu_custom_call.1} parent=1 // pred_fallthru
      _
    // Predicated region
    $region6: #{tpu_custom_call.1} parent=1 // pred_check
      _
    $region7: #{tpu_custom_call.1} parent=1 // pred_check_branch
      %28 = sbr.rel (0) target = $region9
    $region8: #{tpu_custom_call.1} parent=1 // pred_region
      _
    $region9: #{tpu_custom_call.1} parent=1 // pred_fallthru
      _
    // Predicated region
    $region10: #{tpu_custom_call.1} parent=1 // pred_check
      _
    $region11: #{tpu_custom_call.1} parent=1 // pred_check_branch
      %30 = sbr.rel (0) target = $region13
    $region12: #{tpu_custom_call.1} parent=1 // pred_region
      _
    $region13: #{tpu_custom_call.1} parent=1 // pred_fallthru
      _
    // Predicated region
    $region14: #{tpu_custom_call.1} parent=1 // pred_check
      _
    $region15: #{tpu_custom_call.1} parent=1 // pred_check_branch
      %32 = sbr.rel (0) target = $region17
    $region16: #{tpu_custom_call.1} parent=1 // pred_region
      _
    $region17: #{tpu_custom_call.1} parent=1 // pred_fallthru
      _
    // Predicated region
    $region18: #{tpu_custom_call.1} parent=1 // pred_check
      _
    $region19: #{tpu_custom_call.1} parent=1 // pred_check_branch
      %34 = sbr.rel (0) target = $region21
    $region20: #{tpu_custom_call.1} parent=1 // pred_region
      _
    $region21: #{tpu_custom_call.1} parent=1 // pred_fallthru
      _
    // Predicated region
    $region22: #{tpu_custom_call.1} parent=1 // pred_check
      _
    $region23: #{tpu_custom_call.1} parent=1 // pred_check_branch
      %36 = sbr.rel (0) target = $region25
    $region24: #{tpu_custom_call.1} parent=1 // pred_region
      _
    $region25: #{tpu_custom_call.1} parent=1 // pred_fallthru
      _
    // Predicated region
    $region26: #{tpu_custom_call.1} parent=1 // pred_check
      _
    $region27: #{tpu_custom_call.1} parent=1 // pred_check_branch
      %38 = sbr.rel (0) target = $region29
    $region28: #{tpu_custom_call.1} parent=1 // pred_region
      _
    $region29: #{tpu_custom_call.1} parent=1 // pred_fallthru
      _
    // Predicated region
    $region30: #{tpu_custom_call.1} parent=1 // pred_check
      _
    $region31: #{tpu_custom_call.1} parent=1 // pred_check_branch
      %40 = sbr.rel (0) target = $region33
    $region32: #{tpu_custom_call.1} parent=1 // pred_region
      %42 = dma.done [#allocation4], 128
    $region33: #{tpu_custom_call.1} parent=1 // pred_fallthru
      _
    %p44 = scmp.eq.s32.totalorder 0, 0
    // Predicated region
    $region34: #{tpu_custom_call.1} parent=1 // pred_check
      %p45 = pneg %p44
    $region35: #{tpu_custom_call.1} parent=1 // pred_check_branch
      %47 = sbr.rel (%p45) target = $region37
    $region36: #{tpu_custom_call.1} parent=1 // pred_region
      %vm48 = vcmask 254976
      %49 = vst.msk [vmem:[#allocation2] sm:$0x3] %vm48, 0.0
    $region37: #{tpu_custom_call.1} parent=1 // pred_fallthru
      _
    %v50 = vld [vmem:[#allocation2] sm:$0x1]
    %v51 = vld [vmem:[%s1] sm:$0x1]
    %v52 = vld [vmem:[#allocation3] sm:$0xf]
    %vm53 = vcmask 64512
    %v55 = vsel %vm53, %v51, 0
    %vm57 = vcmask 1043456
    %v59 = vsel %vm57, %v52, 0
    %61 = vmatpush.bf16.msra.mxu0 0
    %62 = vmatpush.bf16.msra.mxu0 0
    %63 = vmatpush.bf16.msra.mxu0 0
    %64 = vmatpush.bf16.msra.mxu0 0
    %65 = vmatpush.bf16.msra.mxu0 0
    %66 = vmatpush.bf16.msra.mxu0 0
    %67 = vmatpush.bf16.msra.mxu0 0
    %68 = vmatpush.bf16.msra.mxu0 %v59
    %69 = vmatmul.bf16.gmra.mxu0 %v55
    %v70 = vpop.f32.mrf.mxu0
    %v71 = vadd.f32 0.0, %v70
    %v72 = vpop.f32.mrf.mxu0
    %73 = vdwg.mxu0
    %v74 = vadd.f32 %v50, %v71
    %vm75 = vcmask 253952
    %76 = vst.msk [vmem:[#allocation2] sm:$0x1] %vm75, %v74
    %v77 = vld [vmem:[#allocation2 + $0x1] sm:$0x1]
    %v78 = vld [vmem:[%s1] sm:$0x1]
    %s79 = scalar_lea.vmem [#allocation3], 4
    %v80 = vld [vmem:[%s79] sm:$0xf]
    %82 = vst [vmem:[#allocation1] ss:$9 sm:$0xff] %v78
    %v83 = vld [vmem:[#allocation1] sm:$0xff]
    %v84 = vshrl.u32 %v83, 16
    %v87 = vsel %vm53, %v84, 0
    %v90 = vsel %vm57, %v80, 0
    %92 = vmatpush.bf16.msra.mxu0 0
    %93 = vmatpush.bf16.msra.mxu0 0
    %94 = vmatpush.bf16.msra.mxu0 0
    %95 = vmatpush.bf16.msra.mxu0 0
    %96 = vmatpush.bf16.msra.mxu0 0
    %97 = vmatpush.bf16.msra.mxu0 0
    %98 = vmatpush.bf16.msra.mxu0 0
    %99 = vmatpush.bf16.msra.mxu0 %v90
    %100 = vmatmul.bf16.gmra.mxu0 %v87
    %v101 = vpop.f32.mrf.mxu0
    %v102 = vadd.f32 0.0, %v101
    %v103 = vpop.f32.mrf.mxu0
    %104 = vdwg.mxu0
    %v105 = vadd.f32 %v77, %v102
    %106 = vst.msk [vmem:[#allocation2 + $0x1] sm:$0x1] %vm75, %v105
    // Predicated region
    $region38: #{tpu_custom_call.1} parent=1 // pred_check
      %p107 = pneg %p44
    $region39: #{tpu_custom_call.1} parent=1 // pred_check_branch
      %109 = sbr.rel (%p107) target = $region41
    $region40: #{tpu_custom_call.1} parent=1 // pred_region
      %v110 = vld [vmem:[#allocation2] sm:$0x3]
      %v111 = vld [vmem:[%s2] sm:$0x3]
      %v112 = vmax.f32 %v111, 1e-09
      %114 = vset.pattern.permute.xlu0 0
      %115 = vperm.xlu0 %114, %v112
      %v116 = vpop.permute.xlu0 %115
      %v118 = vrcp.pop %v116
      %v119 = vmul.f32 %v116, %v118
      %v120 = vsub.f32 1.0, %v119
      %v121 = vmul.f32 %v118, %v120
      %v122 = vadd.f32 %v118, %v121
      %vm123 = vweird.f32 %v116
      %vm124 = vweird.f32 %v118
      %vm125 = vmor %vm123, %vm124
      %v126 = vsel %vm125, %v118, %v122
      %v127 = vand.u32 2147483647, %v116
      %vm128 = vcmp.eq.f32.partialorder %v127, 8.507059e+37
      %v129 = vand.u32 %v116, 2147483648
      %v130 = vor.u32 1.1754944e-38, %v129
      %v131 = vsel %vm128, %v130, %v126
      %v132 = vmul.f32 %v110, %v131
      %v133 = vld [vmem:[%s3] sm:$0xff]
      %v134 = vld [vmem:[%s3 + $0x8] sm:$0xff]
      %v135 = vld [vmem:[%s3 + $0x10] sm:$0xff]
      %v136 = vld [vmem:[%s3 + $0x18] sm:$0xff]
      %v137 = vld [vmem:[%s4] sm:$0x1]
      %v139 = vperm.slane %v137, 0
      %vm141 = vcmask 261120
      %v143 = vsel %vm141, %v132, 0
      %145 = vmatpush.msra.mxu0 0.0
      %146 = vmatpush.msra.mxu0 0.0
      %147 = vmatpush.msra.mxu0 0.0
      %148 = vmatpush.msra.mxu0 0.0
      %149 = vmatpush.msra.mxu0 0.0
      %150 = vmatpush.msra.mxu0 0.0
      %151 = vmatpush.msra.mxu0 0.0
      %152 = vmatpush.msra.mxu0 0.0
      %153 = vmatpush.msra.mxu0 0.0
      %154 = vmatpush.msra.mxu0 0.0
      %155 = vmatpush.msra.mxu0 0.0
      %156 = vmatpush.msra.mxu0 0.0
      %157 = vmatpush.msra.mxu0 %v136
      %158 = vmatpush.msra.mxu0 %v135
      %159 = vmatpush.msra.mxu0 %v134
      %160 = vmatpush.msra.mxu0 %v133
      %161 = vmatmul.f32.gmra.mxu0 %v143
      %v162 = vpop.f32.mrf.mxu0
      %v163 = vadd.f32 %v139, %v162
      %164 = vdwg.mxu0
      %v165 = vmul.f32 %v163, 0.5
      %v166 = vmul.f32 %v163, 0.70710677
      %v167 = vand.u32 2147483647, %v166
      %v168 = vmul.f32 %v167, 0.3275911
      %v169 = vadd.f32 %v168, 1.0
      %v170 = vrcp.pop %v169
      %v171 = vmul.f32 %v169, %v170
      %v172 = vsub.f32 1.0, %v171
      %v173 = vmul.f32 %v170, %v172
      %v174 = vadd.f32 %v170, %v173
      %vm175 = vweird.f32 %v169
      %vm176 = vweird.f32 %v170
      %vm177 = vmor %vm175, %vm176
      %v178 = vsel %vm177, %v170, %v174
      %v179 = vand.u32 2147483647, %v169
      %vm180 = vcmp.eq.f32.partialorder %v179, 8.507059e+37
      %v181 = vand.u32 %v169, 2147483648
      %v182 = vor.u32 1.1754944e-38, %v181
      %v183 = vsel %vm180, %v182, %v178
      %v184 = vmul.f32 1.0, %v183
      %v185 = vmul.f32 %v184, 1.0614054
      %v186 = vadd.f32 %v185, -1.4531521
      %v187 = vmul.f32 %v186, %v184
      %v188 = vadd.f32 %v187, 1.4214138
      %v189 = vmul.f32 %v188, %v184
      %v190 = vadd.f32 %v189, -0.28449672
      %v191 = vmul.f32 %v190, %v184
      %v192 = vadd.f32 %v191, 0.2548296
      %v193 = vmul.f32 %v192, %v184
      %v194 = vsub.f32 0.0, %v167
      %v195 = vmul.f32 %v194, %v167
      %v196 = vmul.f32 %v195, 1.442695
      %v197 = vpow.pop %v196
      %v198 = vmul.f32 %v193, %v197
      %v199 = vsub.f32 1.0, %v198
      %vm200 = vcmp.lt.f32.partialorder %v166, 0.0
      %v201 = vsub.f32 0.0, %v199
      %v202 = vsel %vm200, %v201, %v199
      %v203 = vadd.f32 %v202, 1.0
      %v204 = vmul.f32 %v165, %v203
      %v205 = vld [vmem:[%s5] sm:$0xff]
      %v206 = vld [vmem:[%s5 + $0x8] sm:$0xff]
      %v207 = vld [vmem:[%s5 + $0x10] sm:$0xff]
      %v208 = vld [vmem:[%s5 + $0x18] sm:$0xff]
      %v209 = vld [vmem:[%s6] sm:$0x1]
      %v211 = vperm.slane %v209, 0
      %v214 = vsel %vm141, %v204, 0
      %216 = vmatpush.msra.mxu0 0.0
      %217 = vmatpush.msra.mxu0 0.0
      %218 = vmatpush.msra.mxu0 0.0
      %219 = vmatpush.msra.mxu0 0.0
      %220 = vmatpush.msra.mxu0 0.0
      %221 = vmatpush.msra.mxu0 0.0
      %222 = vmatpush.msra.mxu0 0.0
      %223 = vmatpush.msra.mxu0 0.0
      %224 = vmatpush.msra.mxu0 0.0
      %225 = vmatpush.msra.mxu0 0.0
      %226 = vmatpush.msra.mxu0 0.0
      %227 = vmatpush.msra.mxu0 0.0
      %228 = vmatpush.msra.mxu0 %v208
      %229 = vmatpush.msra.mxu0 %v207
      %230 = vmatpush.msra.mxu0 %v206
      %231 = vmatpush.msra.mxu0 %v205
      %232 = vmatmul.f32.gmra.mxu0 %v214
      %v233 = vpop.f32.mrf.mxu0
      %v234 = vadd.f32 %v211, %v233
      %235 = vdwg.mxu0
      %vm236 = vcmask 25600
      %237 = vst.msk [vmem:[#allocation6] sm:$0x3] %vm236, %v234
    $region41: #{tpu_custom_call.1} parent=1 // pred_fallthru
      _
    // Predicated region
    $region42: #{tpu_custom_call.1} parent=1 // pred_check
      _
    $region43: #{tpu_custom_call.1} parent=1 // pred_check_branch
      %239 = sbr.rel (0) target = $region45
    $region44: #{tpu_custom_call.1} parent=1 // pred_region
      %241 = vsyncadd [#allocation5], 0
      %s243 = sshll.u32 [#allocation6], 4
      %s244 = int_to_ptr.vmem [resolvable:$true] %s243
      %s245 = sshll.u32 %s7, 4
      %s246 = int_to_ptr.hbm [resolvable:$true] %s245
      %248 = dma.vmem_to_hbm [thread:$0]  %s244, 32, %s246, [#allocation5]
    $region45: #{tpu_custom_call.1} parent=1 // pred_fallthru
      _
    // Predicated region
    $region46: #{tpu_custom_call.1} parent=1 // pred_check
      _
    $region47: #{tpu_custom_call.1} parent=1 // pred_check_branch
      %250 = sbr.rel (0) target = $region49
    $region48: #{tpu_custom_call.1} parent=1 // pred_region
      %252 = dma.done [#allocation5], 32
    $region49: #{tpu_custom_call.1} parent=1 // pred_fallthru
      _
    %253 = vsyncpa [#allocation4], 1
    %254 = vsyncpa [#allocation5], 1

// kernel: tpu_custom_call.1
$region0: #{tpu_custom_call.1}
  #allocation0 [shape = 'u32[]', space=smem, size = 0x4, offset = 0x4, fixed_abs, tag = 'smem constant byte address 0x4 - core index']
  #allocation1 [shape = 'u32[72,128]{1,0:T(1,128)}', space=vmem, size = 0x9000, scoped, tag = 'internal scratch']
  #allocation2 [shape = 'f32[2,32]{1,0:T(2,128)}', space=vmem, size = 0x400, scoped, tag = 'scratch operand']
  %s0 = inlined_call_operand.hbm [shape: bf16[2,8,32], index: 0, kind: input, shape index: {}]
  %s1 = inlined_call_operand.vmem [shape: bf16[2,8], index: 1, kind: input, shape index: {}]
  %s2 = inlined_call_operand.vmem [shape: f32[2,1], index: 2, kind: input, shape index: {}]
  %s3 = inlined_call_operand.vmem [shape: f32[32,32], index: 3, kind: input, shape index: {}]
  %s4 = inlined_call_operand.vmem [shape: f32[1,32], index: 4, kind: input, shape index: {}]
  %s5 = inlined_call_operand.vmem [shape: f32[32,4], index: 5, kind: input, shape index: {}]
  %s6 = inlined_call_operand.vmem [shape: f32[1,4], index: 6, kind: input, shape index: {}]
  %s7 = inlined_call_operand.hbm [shape: f32[2,4], index: 7, kind: output, shape index: {}]
  %s8 = sld [smem:[#allocation0]]
  $region50: #{tpu_custom_call.1} parent=0
    _
  %s10 = ssub.s32 1, %s8
  %s11 = scalar_select 0, %s10, %s8
  $region1: #{tpu_custom_call.1} parent=0
    #allocation3 [shape = 'u8[4096]{0}', space=vmem, size = 0x1000, scoped, tag = 'input window, operand 0, single buffered']
    #allocation4 [shape = 's32[1]{0}', space=sflag, size = 0x4, scoped, tag = 'scoped memory for tpu_custom_call.1']
    #allocation5 [shape = 's32[1]{0}', space=sflag, size = 0x4, scoped, tag = 'scoped memory for tpu_custom_call.1']
    #allocation6 [shape = 'u8[1024]{0}', space=vmem, size = 0x400, scoped, tag = 'output window, operand 0, single buffered']
    %12 = vsyncpa [#allocation4], 0
    %13 = vsyncpa [#allocation5], 0
    // Predicated region
    $region2: #{tpu_custom_call.1} parent=1 // pred_check
      _
    $region3: #{tpu_custom_call.1} parent=1 // pred_check_branch
      %15 = sbr.rel (0) target = $region5
    $region4: #{tpu_custom_call.1} parent=1 // pred_region
      %17 = vsyncadd [#allocation4], 0
      %s18 = sshll.u32 %s0, 4
      %s19 = int_to_ptr.hbm [resolvable:$true] %s18
      %s20 = sshll.u32 [#allocation3], 4
      %s21 = int_to_ptr.vmem [resolvable:$true] %s20
      %26 = dma.hbm_to_vmem [thread:$0]  %s19, 128, %s21, [#allocation4], 64, 64, 4
    $region5: #{tpu_custom_call.1} parent=1 // pred_fallthru
      _
    // Predicated region
    $region6: #{tpu_custom_call.1} parent=1 // pred_check
      _
    $region7: #{tpu_custom_call.1} parent=1 // pred_check_branch
      %28 = sbr.rel (0) target = $region9
    $region8: #{tpu_custom_call.1} parent=1 // pred_region
      _
    $region9: #{tpu_custom_call.1} parent=1 // pred_fallthru
      _
    // Predicated region
    $region10: #{tpu_custom_call.1} parent=1 // pred_check
      _
    $region11: #{tpu_custom_call.1} parent=1 // pred_check_branch
      %30 = sbr.rel (0) target = $region13
    $region12: #{tpu_custom_call.1} parent=1 // pred_region
      _
    $region13: #{tpu_custom_call.1} parent=1 // pred_fallthru
      _
    // Predicated region
    $region14: #{tpu_custom_call.1} parent=1 // pred_check
      _
    $region15: #{tpu_custom_call.1} parent=1 // pred_check_branch
      %32 = sbr.rel (0) target = $region17
    $region16: #{tpu_custom_call.1} parent=1 // pred_region
      _
    $region17: #{tpu_custom_call.1} parent=1 // pred_fallthru
      _
    // Predicated region
    $region18: #{tpu_custom_call.1} parent=1 // pred_check
      _
    $region19: #{tpu_custom_call.1} parent=1 // pred_check_branch
      %34 = sbr.rel (0) target = $region21
    $region20: #{tpu_custom_call.1} parent=1 // pred_region
      _
    $region21: #{tpu_custom_call.1} parent=1 // pred_fallthru
      _
    // Predicated region
    $region22: #{tpu_custom_call.1} parent=1 // pred_check
      _
    $region23: #{tpu_custom_call.1} parent=1 // pred_check_branch
      %36 = sbr.rel (0) target = $region25
    $region24: #{tpu_custom_call.1} parent=1 // pred_region
      _
    $region25: #{tpu_custom_call.1} parent=1 // pred_fallthru
      _
    // Predicated region
    $region26: #{tpu_custom_call.1} parent=1 // pred_check
      _
    $region27: #{tpu_custom_call.1} parent=1 // pred_check_branch
      %38 = sbr.rel (0) target = $region29
    $region28: #{tpu_custom_call.1} parent=1 // pred_region
      _
    $region29: #{tpu_custom_call.1} parent=1 // pred_fallthru
      _
    // Predicated region
    $region30: #{tpu_custom_call.1} parent=1 // pred_check
      _
    $region31: #{tpu_custom_call.1} parent=1 // pred_check_branch
      %40 = sbr.rel (0) target = $region33
    $region32: #{tpu_custom_call.1} parent=1 // pred_region
      %42 = dma.done [#allocation4], 128
    $region33: #{tpu_custom_call.1} parent=1 // pred_fallthru
      _
    %p44 = scmp.eq.s32.totalorder 0, 0
    // Predicated region
    $region34: #{tpu_custom_call.1} parent=1 // pred_check
      %p45 = pneg %p44
    $region35: #{tpu_custom_call.1} parent=1 // pred_check_branch
      %47 = sbr.rel (%p45) target = $region37
    $region36: #{tpu_custom_call.1} parent=1 // pred_region
      %vm48 = vcmask 254976
      %49 = vst.msk [vmem:[#allocation2] sm:$0x3] %vm48, 0.0
    $region37: #{tpu_custom_call.1} parent=1 // pred_fallthru
      _
    %v50 = vld [vmem:[#allocation2] sm:$0x1]
    %v51 = vld [vmem:[%s1] sm:$0x1]
    %v52 = vld [vmem:[#allocation3] sm:$0xf]
    %vm53 = vcmask 64512
    %v55 = vsel %vm53, %v51, 0
    %vm57 = vcmask 1043456
    %v59 = vsel %vm57, %v52, 0
    %61 = vmatpush.bf16.msra.mxu0 0
    %62 = vmatpush.bf16.msra.mxu0 0
    %63 = vmatpush.bf16.msra.mxu0 0
    %64 = vmatpush.bf16.msra.mxu0 0
    %65 = vmatpush.bf16.msra.mxu0 0
    %66 = vmatpush.bf16.msra.mxu0 0
    %67 = vmatpush.bf16.msra.mxu0 0
    %68 = vmatpush.bf16.msra.mxu0 %v59
    %69 = vmatmul.bf16.gmra.mxu0 %v55
    %v70 = vpop.f32.mrf.mxu0
    %v71 = vadd.f32 0.0, %v70
    %v72 = vpop.f32.mrf.mxu0
    %73 = vdwg.mxu0
    %v74 = vadd.f32 %v50, %v71
    %vm75 = vcmask 253952
    %76 = vst.msk [vmem:[#allocation2] sm:$0x1] %vm75, %v74
    %v77 = vld [vmem:[#allocation2 + $0x1] sm:$0x1]
    %v78 = vld [vmem:[%s1] sm:$0x1]
    %s79 = scalar_lea.vmem [#allocation3], 4
    %v80 = vld [vmem:[%s79] sm:$0xf]
    %82 = vst [vmem:[#allocation1] ss:$9 sm:$0xff] %v78
    %v83 = vld [vmem:[#allocation1] sm:$0xff]
    %v84 = vshrl.u32 %v83, 16
    %v87 = vsel %vm53, %v84, 0
    %v90 = vsel %vm57, %v80, 0
    %92 = vmatpush.bf16.msra.mxu0 0
    %93 = vmatpush.bf16.msra.mxu0 0
    %94 = vmatpush.bf16.msra.mxu0 0
    %95 = vmatpush.bf16.msra.mxu0 0
    %96 = vmatpush.bf16.msra.mxu0 0
    %97 = vmatpush.bf16.msra.mxu0 0
    %98 = vmatpush.bf16.msra.mxu0 0
    %99 = vmatpush.bf16.msra.mxu0 %v90
    %100 = vmatmul.bf16.gmra.mxu0 %v87
    %v101 = vpop.f32.mrf.mxu0
    %v102 = vadd.f32 0.0, %v101
    %v103 = vpop.f32.mrf.mxu0
    %104 = vdwg.mxu0
    %v105 = vadd.f32 %v77, %v102
    %106 = vst.msk [vmem:[#allocation2 + $0x1] sm:$0x1] %vm75, %v105
    // Predicated region
    $region38: #{tpu_custom_call.1} parent=1 // pred_check
      %p107 = pneg %p44
    $region39: #{tpu_custom_call.1} parent=1 // pred_check_branch
      %109 = sbr.rel (%p107) target = $region41
    $region40: #{tpu_custom_call.1} parent=1 // pred_region
      %v110 = vld [vmem:[#allocation2] sm:$0x3]
      %v111 = vld [vmem:[%s2] sm:$0x3]
      %v112 = vmax.f32 %v111, 1e-09
      %114 = vset.pattern.permute.xlu0 0
      %115 = vperm.xlu0 %114, %v112
      %v116 = vpop.permute.xlu0 %115
      %v118 = vrcp.pop %v116
      %v119 = vmul.f32 %v116, %v118
      %v120 = vsub.f32 1.0, %v119
      %v121 = vmul.f32 %v118, %v120
      %v122 = vadd.f32 %v118, %v121
      %vm123 = vweird.f32 %v116
      %vm124 = vweird.f32 %v118
      %vm125 = vmor %vm123, %vm124
      %v126 = vsel %vm125, %v118, %v122
      %v127 = vand.u32 2147483647, %v116
      %vm128 = vcmp.eq.f32.partialorder %v127, 8.507059e+37
      %v129 = vand.u32 %v116, 2147483648
      %v130 = vor.u32 1.1754944e-38, %v129
      %v131 = vsel %vm128, %v130, %v126
      %v132 = vmul.f32 %v110, %v131
      %v133 = vld [vmem:[%s3] sm:$0xff]
      %v134 = vld [vmem:[%s3 + $0x8] sm:$0xff]
      %v135 = vld [vmem:[%s3 + $0x10] sm:$0xff]
      %v136 = vld [vmem:[%s3 + $0x18] sm:$0xff]
      %v137 = vld [vmem:[%s4] sm:$0x1]
      %v139 = vperm.slane %v137, 0
      %vm141 = vcmask 261120
      %v143 = vsel %vm141, %v132, 0
      %145 = vmatpush.msra.mxu0 0.0
      %146 = vmatpush.msra.mxu0 0.0
      %147 = vmatpush.msra.mxu0 0.0
      %148 = vmatpush.msra.mxu0 0.0
      %149 = vmatpush.msra.mxu0 0.0
      %150 = vmatpush.msra.mxu0 0.0
      %151 = vmatpush.msra.mxu0 0.0
      %152 = vmatpush.msra.mxu0 0.0
      %153 = vmatpush.msra.mxu0 0.0
      %154 = vmatpush.msra.mxu0 0.0
      %155 = vmatpush.msra.mxu0 0.0
      %156 = vmatpush.msra.mxu0 0.0
      %157 = vmatpush.msra.mxu0 %v136
      %158 = vmatpush.msra.mxu0 %v135
      %159 = vmatpush.msra.mxu0 %v134
      %160 = vmatpush.msra.mxu0 %v133
      %161 = vmatmul.f32.gmra.mxu0 %v143
      %v162 = vpop.f32.mrf.mxu0
      %v163 = vadd.f32 %v139, %v162
      %164 = vdwg.mxu0
      %v165 = vmul.f32 %v163, 0.5
      %v166 = vmul.f32 %v163, 0.70710677
      %v167 = vand.u32 2147483647, %v166
      %v168 = vmul.f32 %v167, 0.3275911
      %v169 = vadd.f32 %v168, 1.0
      %v170 = vrcp.pop %v169
      %v171 = vmul.f32 %v169, %v170
      %v172 = vsub.f32 1.0, %v171
      %v173 = vmul.f32 %v170, %v172
      %v174 = vadd.f32 %v170, %v173
      %vm175 = vweird.f32 %v169
      %vm176 = vweird.f32 %v170
      %vm177 = vmor %vm175, %vm176
      %v178 = vsel %vm177, %v170, %v174
      %v179 = vand.u32 2147483647, %v169
      %vm180 = vcmp.eq.f32.partialorder %v179, 8.507059e+37
      %v181 = vand.u32 %v169, 2147483648
      %v182 = vor.u32 1.1754944e-38, %v181
      %v183 = vsel %vm180, %v182, %v178
      %v184 = vmul.f32 1.0, %v183
      %v185 = vmul.f32 %v184, 1.0614054
      %v186 = vadd.f32 %v185, -1.4531521
      %v187 = vmul.f32 %v186, %v184
      %v188 = vadd.f32 %v187, 1.4214138
      %v189 = vmul.f32 %v188, %v184
      %v190 = vadd.f32 %v189, -0.28449672
      %v191 = vmul.f32 %v190, %v184
      %v192 = vadd.f32 %v191, 0.2548296
      %v193 = vmul.f32 %v192, %v184
      %v194 = vsub.f32 0.0, %v167
      %v195 = vmul.f32 %v194, %v167
      %v196 = vmul.f32 %v195, 1.442695
      %v197 = vpow.pop %v196
      %v198 = vmul.f32 %v193, %v197
      %v199 = vsub.f32 1.0, %v198
      %vm200 = vcmp.lt.f32.partialorder %v166, 0.0
      %v201 = vsub.f32 0.0, %v199
      %v202 = vsel %vm200, %v201, %v199
      %v203 = vadd.f32 %v202, 1.0
      %v204 = vmul.f32 %v165, %v203
      %v205 = vld [vmem:[%s5] sm:$0xff]
      %v206 = vld [vmem:[%s5 + $0x8] sm:$0xff]
      %v207 = vld [vmem:[%s5 + $0x10] sm:$0xff]
      %v208 = vld [vmem:[%s5 + $0x18] sm:$0xff]
      %v209 = vld [vmem:[%s6] sm:$0x1]
      %v211 = vperm.slane %v209, 0
      %v214 = vsel %vm141, %v204, 0
      %216 = vmatpush.msra.mxu0 0.0
      %217 = vmatpush.msra.mxu0 0.0
      %218 = vmatpush.msra.mxu0 0.0
      %219 = vmatpush.msra.mxu0 0.0
      %220 = vmatpush.msra.mxu0 0.0
      %221 = vmatpush.msra.mxu0 0.0
      %222 = vmatpush.msra.mxu0 0.0
      %223 = vmatpush.msra.mxu0 0.0
      %224 = vmatpush.msra.mxu0 0.0
      %225 = vmatpush.msra.mxu0 0.0
      %226 = vmatpush.msra.mxu0 0.0
      %227 = vmatpush.msra.mxu0 0.0
      %228 = vmatpush.msra.mxu0 %v208
      %229 = vmatpush.msra.mxu0 %v207
      %230 = vmatpush.msra.mxu0 %v206
      %231 = vmatpush.msra.mxu0 %v205
      %232 = vmatmul.f32.gmra.mxu0 %v214
      %v233 = vpop.f32.mrf.mxu0
      %v234 = vadd.f32 %v211, %v233
      %235 = vdwg.mxu0
      %vm236 = vcmask 25600
      %237 = vst.msk [vmem:[#allocation6] sm:$0x3] %vm236, %v234
    $region41: #{tpu_custom_call.1} parent=1 // pred_fallthru
      _
    // Predicated region
    $region42: #{tpu_custom_call.1} parent=1 // pred_check
      _
    $region43: #{tpu_custom_call.1} parent=1 // pred_check_branch
      %239 = sbr.rel (0) target = $region45
    $region44: #{tpu_custom_call.1} parent=1 // pred_region
      %241 = vsyncadd [#allocation5], 0
      %s243 = sshll.u32 [#allocation6], 4
      %s244 = int_to_ptr.vmem [resolvable:$true] %s243
      %s245 = sshll.u32 %s7, 4
      %s246 = int_to_ptr.hbm [resolvable:$true] %s245
      %248 = dma.vmem_to_hbm [thread:$0]  %s244, 32, %s246, [#allocation5]
    $region45: #{tpu_custom_call.1} parent=1 // pred_fallthru
      _
    // Predicated region
    $region46: #{tpu_custom_call.1} parent=1 // pred_check
      _
    $region47: #{tpu_custom_call.1} parent=1 // pred_check_branch
      %250 = sbr.rel (0) target = $region49
    $region48: #{tpu_custom_call.1} parent=1 // pred_region
      %252 = dma.done [#allocation5], 32
    $region49: #{tpu_custom_call.1} parent=1 // pred_fallthru
      _
    %253 = vsyncpa [#allocation4], 1
    %254 = vsyncpa [#allocation5], 1

</llo_original>
